<compile_context>
chip_gen: v6e
topology: v6e:2x2x1
jax: 0.10.0
libtpu: 0.0.40
codegen_flags: <defaults>
</compile_context>

<pallas_src>
import math

import jax
import jax.numpy as jnp
from jax.experimental import pallas as pl
from jax.experimental.pallas import tpu as pltpu


def _round_up(v, m):
    return ((v + m - 1) // m) * m


def _linear_param_kernel(x_ref, q_ref, w_ref, b_ref, o_ref):
    """One (tm, tn) output tile.

    x_ref : (tm, I)      activations (compute dtype, e.g. bf16)
    q_ref : (tm, D)      query vectors
    w_ref : (D, I, tn)   weight slab for this O tile
    b_ref : (D, tn)      bias slab for this O tile
    o_ref : (tm, tn)     output tile (final dtype)
    """
    x = x_ref[...]
    q = q_ref[...]
    D = q_ref.shape[1]

    # Bias term folded in as a small extra MXU matmul: (tm, D) @ (D, tn).
    acc = jnp.dot(q, b_ref[...], preferred_element_type=jnp.float32)

    # D is a static (trace-time) constant -> this unrolls.  The z_d block is a
    # VPU broadcast multiply formed right before the MXU matmul; it never
    # touches HBM.
    for d in range(D):
        z_d = x * q[:, d:d + 1]                       # (tm, I)   VPU
        acc = acc + jnp.dot(z_d, w_ref[d],            # (tm,I)@(I,tn)  MXU
                            preferred_element_type=jnp.float32)

    o_ref[...] = acc.astype(o_ref.dtype)


def linear_param_forward(x, query_vectors, W_1, b_1, *,
                         compute_dtype=jnp.bfloat16):
    """Pallas equivalent of Linear_Param.forward (output dtype = x.dtype)."""
    N, I = x.shape
    D = query_vectors.shape[1]
    O = W_1.shape[2]
    assert W_1.shape == (D, I, O) and b_1.shape == (D, O)
    out_dtype = x.dtype
    itemsize = jnp.dtype(compute_dtype).itemsize

    # ---- tile sizes ---------------------------------------------------------
    tm = min(256, _round_up(N, 8))          # sublane-aligned batch tile
    Np = _round_up(N, tm)

    Op = _round_up(O, 128)                  # lane-dense output width
    tn = 128
    # Prefer 256-multiples (v6e/v7x MXU is 2x256x256); keep the double-buffered
    # weight slab comfortably inside every generation's scoped-VMEM budget.
    for cand in (512, 384, 256, 128):
        if Op % cand == 0 and 2 * D * I * cand * itemsize <= (12 << 20):
            tn = cand
            break

    # ---- operand prep: casts + zero padding only (no z / w_aug copies) -----
    x_c = x.astype(compute_dtype)
    q_c = query_vectors.astype(compute_dtype)
    w_c = W_1.astype(compute_dtype)
    b_c = b_1.astype(compute_dtype)

    if Np != N:
        x_c = jnp.zeros((Np, I), compute_dtype).at[:N].set(x_c)
        q_c = jnp.zeros((Np, D), compute_dtype).at[:N].set(q_c)
    if Op != O:
        w_c = jnp.zeros((D, I, Op), compute_dtype).at[:, :, :O].set(w_c)
        b_c = jnp.zeros((D, Op), compute_dtype).at[:, :O].set(b_c)

    grid = (Np // tm, Op // tn)

    # VMEM budget: double-buffered inputs + output + f32 accumulator.
    est = (2 * (tm * I + tm * D + D * I * tn + D * tn) * itemsize
           + 2 * tm * tn * jnp.dtype(out_dtype).itemsize
           + tm * tn * 4)
    vmem_limit = int(min(48 << 20, max(4 * est, 32 << 20)))  # safe on v5e/v6e/v7x

    cost = pl.CostEstimate(
        flops=2 * N * D * I * O + 2 * N * D * O,
        transcendentals=0,
        bytes_accessed=(N * I + N * D + D * I * O + D * O) * itemsize
                       + N * O * jnp.dtype(out_dtype).itemsize,
    )

    out_p = pl.pallas_call(
        _linear_param_kernel,
        out_shape=jax.ShapeDtypeStruct((Np, Op), out_dtype),
        grid_spec=pltpu.PrefetchScalarGridSpec(
            num_scalar_prefetch=0,
            grid=grid,
            in_specs=[
                pl.BlockSpec((tm, I), lambda i, j: (i, 0)),        # x (resident over j)
                pl.BlockSpec((tm, D), lambda i, j: (i, 0)),        # q (resident over j)
                pl.BlockSpec((D, I, tn), lambda i, j: (0, 0, j)),  # W_1 slab
                pl.BlockSpec((D, tn), lambda i, j: (0, j)),        # b_1 slab
            ],
            out_specs=pl.BlockSpec((tm, tn), lambda i, j: (i, j)),
        ),
        compiler_params=pltpu.CompilerParams(
            dimension_semantics=("parallel", "parallel"),
            vmem_limit_bytes=vmem_limit),
        cost_estimate=cost,
    )(x_c, q_c, w_c, b_c)

    if Np != N or Op != O:
        out_p = out_p[:N, :O]
    return out_p


def _reference(x, q, W_1, b_1):
    W = jnp.einsum("nd,dio->nio", q, W_1)
    b = jnp.einsum("nd,do->no", q, b_1)
    y = jnp.squeeze(jnp.matmul(x[:, None, :], W), axis=1) + b
    return y


if __name__ == "__main__":
    # Small shapes consistent with the module: N samples, D query dims,
    # I input features, O output features.
    N, D, I, O = 8, 4, 32, 32

    key = jax.random.PRNGKey(0)
    kx, kq, kw, kb = jax.random.split(key, 4)

    x = jax.random.normal(kx, (N, I), dtype=jnp.float32)
    q = jax.random.normal(kq, (N, D), dtype=jnp.float32)

    # Deterministic xavier_uniform-style init (PyTorch fan conventions).
    #   W_1 (D, I, O): fan_in = I * O, fan_out = D * O
    #   b_1 (D, O)   : fan_in = O,     fan_out = D
    bound_w = math.sqrt(6.0 / (I * O + D * O))
    bound_b = math.sqrt(6.0 / (O + D))
    W_1 = jax.random.uniform(kw, (D, I, O), jnp.float32, -bound_w, bound_w)
    b_1 = jax.random.uniform(kb, (D, O), jnp.float32, -bound_b, bound_b)

    out = jax.block_until_ready(linear_param_forward(x, q, W_1, b_1))

    ref = _reference(x, q, W_1, b_1)
    assert out.shape == (N, O)
    # Tolerance loosened for bf16 MXU operands (f32 accumulation).
    max_err = float(jnp.max(jnp.abs(out - ref)))
    assert jnp.allclose(out, ref, atol=5e-2, rtol=5e-2), (
        f"mismatch vs reference (max abs err {max_err})")

    print("KERNEL_OK")
</pallas_src>

<mosaic_0001>
module attributes {stable_mosaic.version = 11 : i64} {
  func.func @_linear_param_kernel(%arg0: i32, %arg1: i32, %arg2: memref<8x32xbf16, #tpu.memory_space<vmem>>, %arg3: memref<8x4xbf16, #tpu.memory_space<vmem>>, %arg4: memref<4x32x128xbf16, #tpu.memory_space<vmem>>, %arg5: memref<4x128xbf16, #tpu.memory_space<vmem>>, %arg6: memref<8x128xf32, #tpu.memory_space<vmem>>) attributes {dimension_semantics = [#tpu.dimension_semantics<parallel>, #tpu.dimension_semantics<parallel>], iteration_bounds = array<i64: 1, 1>, scalar_prefetch = 0 : i64, scratch_operands = 0 : i64, tpu.core_type = #tpu.core_type<tc>, window_params = [{transform_indices = @transform_0, window_bounds = array<i64: 8, 32>}, {transform_indices = @transform_1, window_bounds = array<i64: 8, 4>}, {transform_indices = @transform_2, window_bounds = array<i64: 4, 32, 128>}, {transform_indices = @transform_3, window_bounds = array<i64: 4, 128>}, {transform_indices = @transform_4, window_bounds = array<i64: 8, 128>}]} {
    %c0 = arith.constant 0 : index
    %c0_0 = arith.constant 0 : index
    %0 = vector.load %arg2[%c0, %c0_0] : memref<8x32xbf16, #tpu.memory_space<vmem>>, vector<8x32xbf16>
    %c0_1 = arith.constant 0 : index
    %c0_2 = arith.constant 0 : index
    %1 = vector.load %arg3[%c0_1, %c0_2] : memref<8x4xbf16, #tpu.memory_space<vmem>>, vector<8x4xbf16>
    %c0_3 = arith.constant 0 : index
    %c0_4 = arith.constant 0 : index
    %2 = vector.load %arg5[%c0_3, %c0_4] : memref<4x128xbf16, #tpu.memory_space<vmem>>, vector<4x128xbf16>
    %cst = arith.constant dense<0.000000e+00> : vector<8x128xf32>
    %3 = tpu.matmul %1, %2, %cst {dimension_numbers = #tpu.dot_dimension_numbers<[1], [0], [0], [1], [0, 0, 1, 1], [], []>} : vector<8x4xbf16>, vector<4x128xbf16>, vector<8x128xf32> -> vector<8x128xf32>
    %4 = vector.extract_strided_slice %1 {offsets = [0, 0], sizes = [8, 1], strides = [1, 1]} : vector<8x4xbf16> to vector<8x1xbf16>
    %5 = vector.broadcast %4 : vector<8x1xbf16> to vector<8x32xbf16>
    %6 = arith.mulf %0, %5 : vector<8x32xbf16>
    %c0_5 = arith.constant 0 : index
    %c0_6 = arith.constant 0 : index
    %c0_7 = arith.constant 0 : index
    %7 = vector.load %arg4[%c0_5, %c0_6, %c0_7] : memref<4x32x128xbf16, #tpu.memory_space<vmem>>, vector<1x32x128xbf16>
    %8 = vector.shape_cast %7 : vector<1x32x128xbf16> to vector<32x128xbf16>
    %cst_8 = arith.constant dense<0.000000e+00> : vector<8x128xf32>
    %9 = tpu.matmul %6, %8, %cst_8 {dimension_numbers = #tpu.dot_dimension_numbers<[1], [0], [0], [1], [0, 0, 1, 1], [], []>} : vector<8x32xbf16>, vector<32x128xbf16>, vector<8x128xf32> -> vector<8x128xf32>
    %10 = arith.addf %3, %9 : vector<8x128xf32>
    %11 = vector.extract_strided_slice %1 {offsets = [0, 1], sizes = [8, 1], strides = [1, 1]} : vector<8x4xbf16> to vector<8x1xbf16>
    %12 = vector.broadcast %11 : vector<8x1xbf16> to vector<8x32xbf16>
    %13 = arith.mulf %0, %12 : vector<8x32xbf16>
    %c1 = arith.constant 1 : index
    %c0_9 = arith.constant 0 : index
    %c0_10 = arith.constant 0 : index
    %14 = vector.load %arg4[%c1, %c0_9, %c0_10] : memref<4x32x128xbf16, #tpu.memory_space<vmem>>, vector<1x32x128xbf16>
    %15 = vector.shape_cast %14 : vector<1x32x128xbf16> to vector<32x128xbf16>
    %cst_11 = arith.constant dense<0.000000e+00> : vector<8x128xf32>
    %16 = tpu.matmul %13, %15, %cst_11 {dimension_numbers = #tpu.dot_dimension_numbers<[1], [0], [0], [1], [0, 0, 1, 1], [], []>} : vector<8x32xbf16>, vector<32x128xbf16>, vector<8x128xf32> -> vector<8x128xf32>
    %17 = arith.addf %10, %16 : vector<8x128xf32>
    %18 = vector.extract_strided_slice %1 {offsets = [0, 2], sizes = [8, 1], strides = [1, 1]} : vector<8x4xbf16> to vector<8x1xbf16>
    %19 = vector.broadcast %18 : vector<8x1xbf16> to vector<8x32xbf16>
    %20 = arith.mulf %0, %19 : vector<8x32xbf16>
    %c2 = arith.constant 2 : index
    %c0_12 = arith.constant 0 : index
    %c0_13 = arith.constant 0 : index
    %21 = vector.load %arg4[%c2, %c0_12, %c0_13] : memref<4x32x128xbf16, #tpu.memory_space<vmem>>, vector<1x32x128xbf16>
    %22 = vector.shape_cast %21 : vector<1x32x128xbf16> to vector<32x128xbf16>
    %cst_14 = arith.constant dense<0.000000e+00> : vector<8x128xf32>
    %23 = tpu.matmul %20, %22, %cst_14 {dimension_numbers = #tpu.dot_dimension_numbers<[1], [0], [0], [1], [0, 0, 1, 1], [], []>} : vector<8x32xbf16>, vector<32x128xbf16>, vector<8x128xf32> -> vector<8x128xf32>
    %24 = arith.addf %17, %23 : vector<8x128xf32>
    %25 = vector.extract_strided_slice %1 {offsets = [0, 3], sizes = [8, 1], strides = [1, 1]} : vector<8x4xbf16> to vector<8x1xbf16>
    %26 = vector.broadcast %25 : vector<8x1xbf16> to vector<8x32xbf16>
    %27 = arith.mulf %0, %26 : vector<8x32xbf16>
    %c3 = arith.constant 3 : index
    %c0_15 = arith.constant 0 : index
    %c0_16 = arith.constant 0 : index
    %28 = vector.load %arg4[%c3, %c0_15, %c0_16] : memref<4x32x128xbf16, #tpu.memory_space<vmem>>, vector<1x32x128xbf16>
    %29 = vector.shape_cast %28 : vector<1x32x128xbf16> to vector<32x128xbf16>
    %cst_17 = arith.constant dense<0.000000e+00> : vector<8x128xf32>
    %30 = tpu.matmul %27, %29, %cst_17 {dimension_numbers = #tpu.dot_dimension_numbers<[1], [0], [0], [1], [0, 0, 1, 1], [], []>} : vector<8x32xbf16>, vector<32x128xbf16>, vector<8x128xf32> -> vector<8x128xf32>
    %31 = arith.addf %24, %30 : vector<8x128xf32>
    %c0_18 = arith.constant 0 : index
    %c0_19 = arith.constant 0 : index
    %32 = vector.load %arg6[%c0_18, %c0_19] : memref<8x128xf32, #tpu.memory_space<vmem>>, vector<8x128xf32>
    tpu.vector_store %arg6[%c0_18, %c0_19], %31 {strides = array<i32>} : memref<8x128xf32, #tpu.memory_space<vmem>>, vector<8x128xf32>,
    return
  }
  func.func @transform_0(%arg0: i32, %arg1: i32) -> (i32, i32) {
    %c0_i32 = arith.constant 0 : i32
    %c0_i32_0 = arith.constant 0 : i32
    return %arg0, %c0_i32 : i32, i32
  }
  func.func @transform_1(%arg0: i32, %arg1: i32) -> (i32, i32) {
    %c0_i32 = arith.constant 0 : i32
    %c0_i32_0 = arith.constant 0 : i32
    return %arg0, %c0_i32 : i32, i32
  }
  func.func @transform_2(%arg0: i32, %arg1: i32) -> (i32, i32, i32) {
    %c0_i32 = arith.constant 0 : i32
    %c0_i32_0 = arith.constant 0 : i32
    %c0_i32_1 = arith.constant 0 : i32
    return %c0_i32, %c0_i32_0, %arg1 : i32, i32, i32
  }
  func.func @transform_3(%arg0: i32, %arg1: i32) -> (i32, i32) {
    %c0_i32 = arith.constant 0 : i32
    %c0_i32_0 = arith.constant 0 : i32
    return %c0_i32, %arg1 : i32, i32
  }
  func.func @transform_4(%arg0: i32, %arg1: i32) -> (i32, i32) {
    %c0_i32 = arith.constant 0 : i32
    return %arg0, %arg1 : i32, i32
  }
}

</mosaic_0001>

<llo_original>
// kernel: tpu_custom_call.1
$region0: #{tpu_custom_call.1}
  #allocation0 [shape = 'u32[]', space=smem, size = 0x4, offset = 0x4, fixed_abs, tag = 'smem constant byte address 0x4 - core index']
  #allocation1 [shape = 'u32[144,128]{1,0:T(1,128)}', space=vmem, size = 0x12000, scoped, tag = 'internal scratch']
  %s0 = inlined_call_operand.vmem [shape: bf16[8,32], index: 0, kind: input, shape index: {}]
  %s1 = inlined_call_operand.vmem [shape: bf16[8,4], index: 1, kind: input, shape index: {}]
  %s2 = inlined_call_operand.hbm [shape: bf16[4,32,128], index: 2, kind: input, shape index: {}]
  %s3 = inlined_call_operand.vmem [shape: bf16[4,128], index: 3, kind: input, shape index: {}]
  %s4 = inlined_call_operand.hbm [shape: f32[8,128], index: 4, kind: output, shape index: {}]
  %s5 = sld [smem:[#allocation0]]
  $region30: #{tpu_custom_call.1} parent=0
    _
  %s7 = ssub.s32 1, %s5
  %s8 = scalar_select 0, %s7, %s5
  $region1: #{tpu_custom_call.1} parent=0
    #allocation2 [shape = 'u8[32768]{0}', space=vmem, size = 0x8000, scoped, tag = 'input window, operand 2, single buffered']
    #allocation3 [shape = 's32[1]{0}', space=sflag, size = 0x4, scoped, tag = 'scoped memory for tpu_custom_call.1']
    #allocation4 [shape = 's32[1]{0}', space=sflag, size = 0x4, scoped, tag = 'scoped memory for tpu_custom_call.1']
    #allocation5 [shape = 'u8[4096]{0}', space=vmem, size = 0x1000, scoped, tag = 'output window, operand 0, single buffered']
    %9 = vsyncpa [#allocation3], 0
    %10 = vsyncpa [#allocation4], 0
    // Predicated region
    $region2: #{tpu_custom_call.1} parent=1 // pred_check
      _
    $region3: #{tpu_custom_call.1} parent=1 // pred_check_branch
      %12 = sbr.rel (0) target = $region5
    $region4: #{tpu_custom_call.1} parent=1 // pred_region
      _
    $region5: #{tpu_custom_call.1} parent=1 // pred_fallthru
      _
    // Predicated region
    $region6: #{tpu_custom_call.1} parent=1 // pred_check
      _
    $region7: #{tpu_custom_call.1} parent=1 // pred_check_branch
      %14 = sbr.rel (0) target = $region9
    $region8: #{tpu_custom_call.1} parent=1 // pred_region
      _
    $region9: #{tpu_custom_call.1} parent=1 // pred_fallthru
      _
    // Predicated region
    $region10: #{tpu_custom_call.1} parent=1 // pred_check
      _
    $region11: #{tpu_custom_call.1} parent=1 // pred_check_branch
      %16 = sbr.rel (0) target = $region13
    $region12: #{tpu_custom_call.1} parent=1 // pred_region
      %s18 = ssub.s32 1024, 1024
      %19 = vsyncadd [#allocation3], %s18
      %s20 = sshll.u32 [#allocation2], 4
      %s21 = int_to_ptr.vmem [resolvable:$true] %s20
      %26 = dma.hbm_to_vmem [thread:$0]  %s2, 1024, %s21, [#allocation3], 64, 64, 4
    $region13: #{tpu_custom_call.1} parent=1 // pred_fallthru
      _
    // Predicated region
    $region14: #{tpu_custom_call.1} parent=1 // pred_check
      _
    $region15: #{tpu_custom_call.1} parent=1 // pred_check_branch
      %28 = sbr.rel (0) target = $region17
    $region16: #{tpu_custom_call.1} parent=1 // pred_region
      _
    $region17: #{tpu_custom_call.1} parent=1 // pred_fallthru
      _
    // Predicated region
    $region18: #{tpu_custom_call.1} parent=1 // pred_check
      _
    $region19: #{tpu_custom_call.1} parent=1 // pred_check_branch
      %30 = sbr.rel (0) target = $region21
    $region20: #{tpu_custom_call.1} parent=1 // pred_region
      %31 = dma.done [#allocation3], 1024
    $region21: #{tpu_custom_call.1} parent=1 // pred_fallthru
      _
    %v33 = vld [vmem:[%s0] sm:$0xf]
    %v34 = vld [vmem:[%s1] sm:$0xf]
    %v35 = vld [vmem:[%s3] sm:$0x3]
    %37 = vset.pattern.permute.xlu0 0
    %38 = vperm.xlu0 %37, %v34
    %v39 = vpop.permute.xlu0 %38
    %v42 = vunpack.c.l.s4 839922192
    %v43 = vunpack.c.0.s8 %v42
    %v44 = vlaneseq
    %v45 = vshrl.u32 %v44, 7
    %v46 = vsub.s32 %v43, %v45
    %v47 = vrot.slane %v39, %v46
    %v48 = vmul.bf16 %v33, %v47
    %v49 = vld [vmem:[#allocation2] sm:$0xf]
    %v50 = vld [vmem:[#allocation2 + $0x4] sm:$0xf]
    %v51 = vld [vmem:[#allocation2 + $0x8] sm:$0xf]
    %v52 = vld [vmem:[#allocation2 + $0xc] sm:$0xf]
    %v57 = vunpack.c.l.b16 %v49
    %v58 = vunpack.c.l.b16 %v50
    %v59 = vunpack.c.l.b16 %v51
    %v60 = vunpack.c.l.b16 %v52
    %v61 = vpack.c.b16 %v58, %v57
    %v62 = vpack.c.b16 %v60, %v59
    %vm65 = vcmask 261120
    %v67 = vsel %vm65, %v48, 0
    %69 = vmatprep.subr.bf16.mxu0 0
    %70 = vmatpush1.bf16.msra.mxu0 0
    %71 = vmatprep.subr.bf16.mxu0 0
    %72 = vmatpush1.bf16.msra.mxu0 0
    %73 = vmatprep.subr.bf16.mxu0 0
    %74 = vmatpush1.bf16.msra.mxu0 0
    %75 = vmatprep.subr.bf16.mxu0 0
    %76 = vmatpush1.bf16.msra.mxu0 0
    %77 = vmatprep.subr.bf16.mxu0 0
    %78 = vmatpush1.bf16.msra.mxu0 0
    %79 = vmatprep.subr.bf16.mxu0 0
    %80 = vmatpush1.bf16.msra.mxu0 0
    %81 = vmatprep.subr.bf16.mxu0 0
    %82 = vmatpush1.bf16.msra.mxu0 %v62
    %83 = vmatprep.subr.bf16.mxu0 0
    %84 = vmatpush1.bf16.msra.mxu0 %v61
    %85 = vmatprep.subr.bf16.mxu0 0
    %86 = vmatpush2.bf16.msra.mxu0 0
    %87 = vmatprep.subr.bf16.mxu0 0
    %88 = vmatpush2.bf16.msra.mxu0 0
    %89 = vmatprep.subr.bf16.mxu0 0
    %90 = vmatpush2.bf16.msra.mxu0 0
    %91 = vmatprep.subr.bf16.mxu0 0
    %92 = vmatpush2.bf16.msra.mxu0 0
    %93 = vmatprep.subr.bf16.mxu0 0
    %94 = vmatpush2.bf16.msra.mxu0 0
    %95 = vmatprep.subr.bf16.mxu0 0
    %96 = vmatpush2.bf16.msra.mxu0 0
    %97 = vmatprep.subr.bf16.mxu0 0
    %98 = vmatpush2.bf16.msra.mxu0 0
    %99 = vmatprep.subr.bf16.mxu0 0
    %100 = vmatpush2.bf16.msra.mxu0 0
    %101 = vmatprep.mubr.bf16.mxu0 0
    %102 = vmatmul.mubr.bf16.gmra.mxu0 %v67
    %v103 = vpop.f32.mrf.mxu0
    %v104 = vadd.f32 0.0, %v103
    %v105 = vpop.f32.mrf.mxu0
    %v106 = vpop.f32.mrf.mxu0
    %v107 = vpop.f32.mrf.mxu0
    %108 = vdwg.mxu0
    %vm109 = vcmask 31744
    %v110 = vsel %vm109, %v34, 0
    %vm112 = vcmask 1041408
    %v114 = vsel %vm112, %v35, 0
    %116 = vmatprep.subr.bf16.mxu0 0
    %117 = vmatpush1.bf16.msra.mxu0 0
    %118 = vmatprep.subr.bf16.mxu0 0
    %119 = vmatpush1.bf16.msra.mxu0 0
    %120 = vmatprep.subr.bf16.mxu0 0
    %121 = vmatpush1.bf16.msra.mxu0 0
    %122 = vmatprep.subr.bf16.mxu0 0
    %123 = vmatpush1.bf16.msra.mxu0 0
    %124 = vmatprep.subr.bf16.mxu0 0
    %125 = vmatpush1.bf16.msra.mxu0 0
    %126 = vmatprep.subr.bf16.mxu0 0
    %127 = vmatpush1.bf16.msra.mxu0 0
    %128 = vmatprep.subr.bf16.mxu0 0
    %129 = vmatpush1.bf16.msra.mxu0 0
    %130 = vmatprep.subr.bf16.mxu0 0
    %131 = vmatpush1.bf16.msra.mxu0 %v114
    %132 = vmatprep.subr.bf16.mxu0 0
    %133 = vmatpush2.bf16.msra.mxu0 0
    %134 = vmatprep.subr.bf16.mxu0 0
    %135 = vmatpush2.bf16.msra.mxu0 0
    %136 = vmatprep.subr.bf16.mxu0 0
    %137 = vmatpush2.bf16.msra.mxu0 0
    %138 = vmatprep.subr.bf16.mxu0 0
    %139 = vmatpush2.bf16.msra.mxu0 0
    %140 = vmatprep.subr.bf16.mxu0 0
    %141 = vmatpush2.bf16.msra.mxu0 0
    %142 = vmatprep.subr.bf16.mxu0 0
    %143 = vmatpush2.bf16.msra.mxu0 0
    %144 = vmatprep.subr.bf16.mxu0 0
    %145 = vmatpush2.bf16.msra.mxu0 0
    %146 = vmatprep.subr.bf16.mxu0 0
    %147 = vmatpush2.bf16.msra.mxu0 0
    %148 = vmatprep.mubr.bf16.mxu0 0
    %149 = vmatmul.mubr.bf16.gmra.mxu0 %v110
    %v150 = vpop.f32.mrf.mxu0
    %v151 = vadd.f32 %v104, %v150
    %v152 = vpop.f32.mrf.mxu0
    %v153 = vpop.f32.mrf.mxu0
    %v154 = vpop.f32.mrf.mxu0
    %155 = vdwg.mxu0
    %156 = vset.pattern.permute.xlu0 1
    %157 = vperm.xlu0 %156, %v34
    %v158 = vpop.permute.xlu0 %157
    %v161 = vunpack.c.l.s4 839922192
    %v162 = vunpack.c.0.s8 %v161
    %v163 = vlaneseq
    %v164 = vshrl.u32 %v163, 7
    %v165 = vsub.s32 %v162, %v164
    %v166 = vrot.slane %v158, %v165
    %v167 = vmul.bf16 %v33, %v166
    %s168 = scalar_lea.vmem [#allocation2], 16
    %v169 = vld [vmem:[%s168] sm:$0xf]
    %v170 = vld [vmem:[%s168 + $0x4] sm:$0xf]
    %v171 = vld [vmem:[%s168 + $0x8] sm:$0xf]
    %v172 = vld [vmem:[%s168 + $0xc] sm:$0xf]
    %v177 = vunpack.c.l.b16 %v169
    %v178 = vunpack.c.l.b16 %v170
    %v179 = vunpack.c.l.b16 %v171
    %v180 = vunpack.c.l.b16 %v172
    %v181 = vpack.c.b16 %v178, %v177
    %v182 = vpack.c.b16 %v180, %v179
    %v186 = vsel %vm65, %v167, 0
    %188 = vmatprep.subr.bf16.mxu0 0
    %189 = vmatpush1.bf16.msra.mxu0 0
    %190 = vmatprep.subr.bf16.mxu0 0
    %191 = vmatpush1.bf16.msra.mxu0 0
    %192 = vmatprep.subr.bf16.mxu0 0
    %193 = vmatpush1.bf16.msra.mxu0 0
    %194 = vmatprep.subr.bf16.mxu0 0
    %195 = vmatpush1.bf16.msra.mxu0 0
    %196 = vmatprep.subr.bf16.mxu0 0
    %197 = vmatpush1.bf16.msra.mxu0 0
    %198 = vmatprep.subr.bf16.mxu0 0
    %199 = vmatpush1.bf16.msra.mxu0 0
    %200 = vmatprep.subr.bf16.mxu0 0
    %201 = vmatpush1.bf16.msra.mxu0 %v182
    %202 = vmatprep.subr.bf16.mxu0 0
    %203 = vmatpush1.bf16.msra.mxu0 %v181
    %204 = vmatprep.subr.bf16.mxu0 0
    %205 = vmatpush2.bf16.msra.mxu0 0
    %206 = vmatprep.subr.bf16.mxu0 0
    %207 = vmatpush2.bf16.msra.mxu0 0
    %208 = vmatprep.subr.bf16.mxu0 0
    %209 = vmatpush2.bf16.msra.mxu0 0
    %210 = vmatprep.subr.bf16.mxu0 0
    %211 = vmatpush2.bf16.msra.mxu0 0
    %212 = vmatprep.subr.bf16.mxu0 0
    %213 = vmatpush2.bf16.msra.mxu0 0
    %214 = vmatprep.subr.bf16.mxu0 0
    %215 = vmatpush2.bf16.msra.mxu0 0
    %216 = vmatprep.subr.bf16.mxu0 0
    %217 = vmatpush2.bf16.msra.mxu0 0
    %218 = vmatprep.subr.bf16.mxu0 0
    %219 = vmatpush2.bf16.msra.mxu0 0
    %220 = vmatprep.mubr.bf16.mxu0 0
    %221 = vmatmul.mubr.bf16.gmra.mxu0 %v186
    %v222 = vpop.f32.mrf.mxu0
    %v223 = vadd.f32 0.0, %v222
    %v224 = vpop.f32.mrf.mxu0
    %v225 = vpop.f32.mrf.mxu0
    %v226 = vpop.f32.mrf.mxu0
    %227 = vdwg.mxu0
    %v228 = vadd.f32 %v151, %v223
    %229 = vset.pattern.permute.xlu0 2
    %230 = vperm.xlu0 %229, %v34
    %v231 = vpop.permute.xlu0 %230
    %v234 = vunpack.c.l.s4 839922192
    %v235 = vunpack.c.0.s8 %v234
    %v236 = vlaneseq
    %v237 = vshrl.u32 %v236, 7
    %v238 = vsub.s32 %v235, %v237
    %v239 = vrot.slane %v231, %v238
    %v240 = vmul.bf16 %v33, %v239
    %s241 = scalar_lea.vmem [#allocation2], 32
    %v242 = vld [vmem:[%s241] sm:$0xf]
    %v243 = vld [vmem:[%s241 + $0x4] sm:$0xf]
    %v244 = vld [vmem:[%s241 + $0x8] sm:$0xf]
    %v245 = vld [vmem:[%s241 + $0xc] sm:$0xf]
    %v250 = vunpack.c.l.b16 %v242
    %v251 = vunpack.c.l.b16 %v243
    %v252 = vunpack.c.l.b16 %v244
    %v253 = vunpack.c.l.b16 %v245
    %v254 = vpack.c.b16 %v251, %v250
    %v255 = vpack.c.b16 %v253, %v252
    %v259 = vsel %vm65, %v240, 0
    %261 = vmatprep.subr.bf16.mxu0 0
    %262 = vmatpush1.bf16.msra.mxu0 0
    %263 = vmatprep.subr.bf16.mxu0 0
    %264 = vmatpush1.bf16.msra.mxu0 0
    %265 = vmatprep.subr.bf16.mxu0 0
    %266 = vmatpush1.bf16.msra.mxu0 0
    %267 = vmatprep.subr.bf16.mxu0 0
    %268 = vmatpush1.bf16.msra.mxu0 0
    %269 = vmatprep.subr.bf16.mxu0 0
    %270 = vmatpush1.bf16.msra.mxu0 0
    %271 = vmatprep.subr.bf16.mxu0 0
    %272 = vmatpush1.bf16.msra.mxu0 0
    %273 = vmatprep.subr.bf16.mxu0 0
    %274 = vmatpush1.bf16.msra.mxu0 %v255
    %275 = vmatprep.subr.bf16.mxu0 0
    %276 = vmatpush1.bf16.msra.mxu0 %v254
    %277 = vmatprep.subr.bf16.mxu0 0
    %278 = vmatpush2.bf16.msra.mxu0 0
    %279 = vmatprep.subr.bf16.mxu0 0
    %280 = vmatpush2.bf16.msra.mxu0 0
    %281 = vmatprep.subr.bf16.mxu0 0
    %282 = vmatpush2.bf16.msra.mxu0 0
    %283 = vmatprep.subr.bf16.mxu0 0
    %284 = vmatpush2.bf16.msra.mxu0 0
    %285 = vmatprep.subr.bf16.mxu0 0
    %286 = vmatpush2.bf16.msra.mxu0 0
    %287 = vmatprep.subr.bf16.mxu0 0
    %288 = vmatpush2.bf16.msra.mxu0 0
    %289 = vmatprep.subr.bf16.mxu0 0
    %290 = vmatpush2.bf16.msra.mxu0 0
    %291 = vmatprep.subr.bf16.mxu0 0
    %292 = vmatpush2.bf16.msra.mxu0 0
    %293 = vmatprep.mubr.bf16.mxu0 0
    %294 = vmatmul.mubr.bf16.gmra.mxu0 %v259
    %v295 = vpop.f32.mrf.mxu0
    %v296 = vadd.f32 0.0, %v295
    %v297 = vpop.f32.mrf.mxu0
    %v298 = vpop.f32.mrf.mxu0
    %v299 = vpop.f32.mrf.mxu0
    %300 = vdwg.mxu0
    %v301 = vadd.f32 %v228, %v296
    %302 = vset.pattern.permute.xlu0 3
    %303 = vperm.xlu0 %302, %v34
    %v304 = vpop.permute.xlu0 %303
    %v307 = vunpack.c.l.s4 839922192
    %v308 = vunpack.c.0.s8 %v307
    %v309 = vlaneseq
    %v310 = vshrl.u32 %v309, 7
    %v311 = vsub.s32 %v308, %v310
    %v312 = vrot.slane %v304, %v311
    %v313 = vmul.bf16 %v33, %v312
    %s314 = scalar_lea.vmem [#allocation2], 48
    %v315 = vld [vmem:[%s314] sm:$0xf]
    %v316 = vld [vmem:[%s314 + $0x4] sm:$0xf]
    %v317 = vld [vmem:[%s314 + $0x8] sm:$0xf]
    %v318 = vld [vmem:[%s314 + $0xc] sm:$0xf]
    %v323 = vunpack.c.l.b16 %v315
    %v324 = vunpack.c.l.b16 %v316
    %v325 = vunpack.c.l.b16 %v317
    %v326 = vunpack.c.l.b16 %v318
    %v327 = vpack.c.b16 %v324, %v323
    %v328 = vpack.c.b16 %v326, %v325
    %v332 = vsel %vm65, %v313, 0
    %334 = vmatprep.subr.bf16.mxu0 0
    %335 = vmatpush1.bf16.msra.mxu0 0
    %336 = vmatprep.subr.bf16.mxu0 0
    %337 = vmatpush1.bf16.msra.mxu0 0
    %338 = vmatprep.subr.bf16.mxu0 0
    %339 = vmatpush1.bf16.msra.mxu0 0
    %340 = vmatprep.subr.bf16.mxu0 0
    %341 = vmatpush1.bf16.msra.mxu0 0
    %342 = vmatprep.subr.bf16.mxu0 0
    %343 = vmatpush1.bf16.msra.mxu0 0
    %344 = vmatprep.subr.bf16.mxu0 0
    %345 = vmatpush1.bf16.msra.mxu0 0
    %346 = vmatprep.subr.bf16.mxu0 0
    %347 = vmatpush1.bf16.msra.mxu0 %v328
    %348 = vmatprep.subr.bf16.mxu0 0
    %349 = vmatpush1.bf16.msra.mxu0 %v327
    %350 = vmatprep.subr.bf16.mxu0 0
    %351 = vmatpush2.bf16.msra.mxu0 0
    %352 = vmatprep.subr.bf16.mxu0 0
    %353 = vmatpush2.bf16.msra.mxu0 0
    %354 = vmatprep.subr.bf16.mxu0 0
    %355 = vmatpush2.bf16.msra.mxu0 0
    %356 = vmatprep.subr.bf16.mxu0 0
    %357 = vmatpush2.bf16.msra.mxu0 0
    %358 = vmatprep.subr.bf16.mxu0 0
    %359 = vmatpush2.bf16.msra.mxu0 0
    %360 = vmatprep.subr.bf16.mxu0 0
    %361 = vmatpush2.bf16.msra.mxu0 0
    %362 = vmatprep.subr.bf16.mxu0 0
    %363 = vmatpush2.bf16.msra.mxu0 0
    %364 = vmatprep.subr.bf16.mxu0 0
    %365 = vmatpush2.bf16.msra.mxu0 0
    %366 = vmatprep.mubr.bf16.mxu0 0
    %367 = vmatmul.mubr.bf16.gmra.mxu0 %v332
    %v368 = vpop.f32.mrf.mxu0
    %v369 = vadd.f32 0.0, %v368
    %v370 = vpop.f32.mrf.mxu0
    %v371 = vpop.f32.mrf.mxu0
    %v372 = vpop.f32.mrf.mxu0
    %373 = vdwg.mxu0
    %v374 = vadd.f32 %v301, %v369
    %375 = vst [vmem:[#allocation5] sm:$0xff] %v374
    // Predicated region
    $region22: #{tpu_custom_call.1} parent=1 // pred_check
      _
    $region23: #{tpu_custom_call.1} parent=1 // pred_check_branch
      %377 = sbr.rel (0) target = $region25
    $region24: #{tpu_custom_call.1} parent=1 // pred_region
      %s379 = ssub.s32 128, 128
      %380 = vsyncadd [#allocation4], %s379
      %s382 = sshll.u32 [#allocation5], 4
      %s383 = int_to_ptr.vmem [resolvable:$true] %s382
      %385 = dma.vmem_to_hbm [thread:$0]  %s383, 128, %s4, [#allocation4]
    $region25: #{tpu_custom_call.1} parent=1 // pred_fallthru
      _
    // Predicated region
    $region26: #{tpu_custom_call.1} parent=1 // pred_check
      _
    $region27: #{tpu_custom_call.1} parent=1 // pred_check_branch
      %387 = sbr.rel (0) target = $region29
    $region28: #{tpu_custom_call.1} parent=1 // pred_region
      %388 = dma.done [#allocation4], 128
    $region29: #{tpu_custom_call.1} parent=1 // pred_fallthru
      _
    %389 = vsyncpa [#allocation3], 1
    %390 = vsyncpa [#allocation4], 1

</llo_original>
